<compile_context>
chip_gen: v6e
topology: v6e:2x2x1
jax: 0.10.0
libtpu: 0.0.40
codegen_flags: <defaults>
</compile_context>

<pallas_src>
import math

import jax
import jax.numpy as jnp
from jax import lax
from jax.experimental import pallas as pl
from jax.experimental.pallas import tpu as pltpu


# --------------------------------------------------------------------------- #
# Kernels
# --------------------------------------------------------------------------- #
def _qkv_proj_kernel(x_ref, wq_ref, wk_ref, wv_ref, q_ref, k_ref, v_ref):
    """Per (batch, seq-tile): Q/K/V = x @ W{q,k,v}.T (scale folded into Wq)."""
    x = x_ref[...]                                      # (TS, H), input dtype
    q_ref[...] = jnp.dot(x, wq_ref[...],
                         preferred_element_type=jnp.float32).astype(q_ref.dtype)
    k_ref[...] = jnp.dot(x, wk_ref[...],
                         preferred_element_type=jnp.float32).astype(k_ref.dtype)
    v_ref[...] = jnp.dot(x, wv_ref[...],
                         preferred_element_type=jnp.float32).astype(v_ref.dtype)
    # TODO(synk): when H % 128 == 0, fuse the three weights into one (H, 3H)
    # matmul (lane-aligned slices) to better fill the 256-wide MXU N dim.


def _flash_attn_kernel(q_ref, k_ref, v_ref, bias_ref, o_ref,
                       m_scr, l_scr, acc_scr):
    """Grid: (batch, query-tile, kv-tile); kv-tile is the reduction axis."""
    ki = pl.program_id(2)

    @pl.when(ki == 0)
    def _init():
        m_scr[...] = jnp.full(m_scr.shape, -jnp.inf, dtype=m_scr.dtype)
        l_scr[...] = jnp.zeros(l_scr.shape, dtype=l_scr.dtype)
        acc_scr[...] = jnp.zeros(acc_scr.shape, dtype=acc_scr.dtype)

    # scores = (Q / sqrt(H)) @ K^T — NT matmul on the MXU, operands in the
    # input dtype (bf16-native when serving bf16), f32 accumulation.
    s = lax.dot_general(q_ref[...], k_ref[...], (((1,), (1,)), ((), ())),
                        preferred_element_type=jnp.float32)     # (TQ, TKV) f32
    s = s + bias_ref[...]                                        # additive mask (1, TKV)

    # Online (flash) softmax update.
    m_prev = m_scr[...]
    m_new = jnp.maximum(m_prev, jnp.max(s, axis=-1, keepdims=True))
    alpha = jnp.exp(m_prev - m_new)
    p = jnp.exp(s - m_new)
    l_scr[...] = alpha * l_scr[...] + jnp.sum(p, axis=-1, keepdims=True)
    acc_scr[...] = alpha * acc_scr[...] + jnp.dot(
        p.astype(v_ref.dtype), v_ref[...], preferred_element_type=jnp.float32)
    m_scr[...] = m_new

    @pl.when(ki == pl.num_programs(2) - 1)
    def _finalize():
        # approx=True runs on the EUP slot (effectively free) for low-precision
        # serving; keep the exact reciprocal for the f32 tolerance path.
        exact = jnp.dtype(o_ref.dtype) == jnp.float32
        inv_l = pl.reciprocal(l_scr[...], approx=not exact)
        o_ref[...] = (acc_scr[...] * inv_l).astype(o_ref.dtype)


# --------------------------------------------------------------------------- #
# Tiling / VMEM helpers
# --------------------------------------------------------------------------- #
def _round_up(x, m):
    return (x + m - 1) // m * m


def _choose_tile(s, preferred, align):
    """Largest multiple of `align` <= preferred that divides s (else s itself)."""
    if s <= preferred:
        return s
    t = (min(s, preferred) // align) * align
    while t >= align:
        if s % t == 0:
            return t
        t -= align
    return s


def _sublane(dtype):
    # Sublane granularity: 8 for f32, 16 for bf16, 32 for int8/fp8.
    return max(8, 32 // jnp.dtype(dtype).itemsize)


def _is_v5e():
    try:
        kind = jax.devices()[0].device_kind.lower()
    except Exception:
        return False
    return ("v5e" in kind) or ("v5 lite" in kind) or ("v5lite" in kind)


def _pad_tile_bytes(rows, cols, itemsize):
    # VMEM footprint of one buffer, rounded up to the (8, 128) layout tile.
    return _round_up(max(rows, 1), 8) * _round_up(max(cols, 1), 128) * itemsize


def _vmem_limit(est_bytes):
    # Give the compiler 2x the estimated footprint, but never shrink below the
    # 32 MiB default and never exceed v7x's 64 MiB physical VMEM per core.
    return int(min(64 * 1024 * 1024, max(32 * 1024 * 1024, 2 * est_bytes)))


# --------------------------------------------------------------------------- #
# pallas_call wrappers
# --------------------------------------------------------------------------- #
def _qkv_projection(x, wq_t, wk_t, wv_t, *, ts):
    B, S, H = x.shape
    dt = x.dtype
    isz = jnp.dtype(dt).itemsize
    est = (2 * _pad_tile_bytes(ts, H, isz)              # x tile (double-buffered)
           + 2 * 3 * _pad_tile_bytes(H, H, isz)         # resident weights
           + 2 * 3 * _pad_tile_bytes(ts, H, isz))       # q/k/v output tiles
    out_sds = jax.ShapeDtypeStruct((B, S, H), dt)
    return pl.pallas_call(
        _qkv_proj_kernel,
        out_shape=(out_sds, out_sds, out_sds),
        grid_spec=pltpu.PrefetchScalarGridSpec(
            num_scalar_prefetch=0,
            grid=(B, S // ts),
            in_specs=[
                pl.BlockSpec((pl.Squeezed(), ts, H), lambda b, si: (b, si, 0)),
                # Constant block index -> weights stay resident across the grid.
                # TODO(synk): pipeline_mode=pl.Buffered(1) would halve weight
                # VMEM; for H >= ~1.5K bf16 on v7x tile the weights along H
                # (extra grid axis) instead of keeping them resident.
                pl.BlockSpec((H, H), lambda b, si: (0, 0)),
                pl.BlockSpec((H, H), lambda b, si: (0, 0)),
                pl.BlockSpec((H, H), lambda b, si: (0, 0)),
            ],
            out_specs=[
                pl.BlockSpec((pl.Squeezed(), ts, H), lambda b, si: (b, si, 0)),
                pl.BlockSpec((pl.Squeezed(), ts, H), lambda b, si: (b, si, 0)),
                pl.BlockSpec((pl.Squeezed(), ts, H), lambda b, si: (b, si, 0)),
            ],
        ),
        compiler_params=pltpu.CompilerParams(
            dimension_semantics=("parallel", "parallel"),
            vmem_limit_bytes=_vmem_limit(est)),
    )(x, wq_t, wk_t, wv_t)


def _flash_attention(q, k, v, bias, *, tq, tkv):
    B, S, H = q.shape
    dt = q.dtype
    isz = jnp.dtype(dt).itemsize
    est = (2 * _pad_tile_bytes(tq, H, isz)               # q tile
           + 2 * 2 * _pad_tile_bytes(tkv, H, isz)        # k, v tiles
           + 2 * _pad_tile_bytes(1, tkv, 4)              # bias tile
           + 2 * _pad_tile_bytes(tq, H, isz)             # output tile
           + 2 * _pad_tile_bytes(tq, 1, 4)               # m, l scratch
           + _pad_tile_bytes(tq, H, 4)                   # accumulator scratch
           + _pad_tile_bytes(tq, tkv, 4))                # scores temp headroom
    return pl.pallas_call(
        _flash_attn_kernel,
        out_shape=jax.ShapeDtypeStruct((B, S, H), dt),
        grid_spec=pltpu.PrefetchScalarGridSpec(
            num_scalar_prefetch=0,
            grid=(B, S // tq, S // tkv),
            in_specs=[
                # Q tile for this query block (kernel sees (tq, H)).
                pl.BlockSpec((pl.Squeezed(), tq, H), lambda b, qi, ki: (b, qi, 0)),
                # K / V tiles for this kv block (kernel sees (tkv, H)).
                # TODO(synk): bump pipeline_mode=pl.Buffered(3) on K/V if a
                # bundle dump shows the DMA slot exposed for small H.
                pl.BlockSpec((pl.Squeezed(), tkv, H), lambda b, qi, ki: (b, ki, 0)),
                pl.BlockSpec((pl.Squeezed(), tkv, H), lambda b, qi, ki: (b, ki, 0)),
                # Additive mask bias for the kv block (kernel sees (1, tkv)).
                pl.BlockSpec((pl.Squeezed(), 1, tkv), lambda b, qi, ki: (b, 0, ki)),
            ],
            out_specs=pl.BlockSpec((pl.Squeezed(), tq, H),
                                   lambda b, qi, ki: (b, qi, 0)),
            scratch_shapes=[
                pltpu.VMEM((tq, 1), jnp.float32),   # running row max
                pltpu.VMEM((tq, 1), jnp.float32),   # running softmax denom
                pltpu.VMEM((tq, H), jnp.float32),   # output accumulator
            ],
        ),
        compiler_params=pltpu.CompilerParams(
            dimension_semantics=("parallel", "parallel", "arbitrary"),
            vmem_limit_bytes=_vmem_limit(est)),
    )(q, k, v, bias)


def self_attention(inputs, mask, wq, wk, wv, *, tq=None, tkv=None, ts=None):
    """inputs: (B, S, H); mask: (B, S) with 1=keep / 0=mask;
    wq/wk/wv: (H, H) PyTorch-layout Linear weights (out, in)."""
    B, S, H = inputs.shape
    dt = inputs.dtype
    scale = 1.0 / math.sqrt(H)

    # One-time wrapper-side prep (cheap XLA ops, keeps relayout work out of the
    # kernels): weights to (in, out) layout with 1/sqrt(H) folded into Wq, and
    # the 0/1 mask converted to an additive bias.
    wq_t = (wq.T * scale).astype(dt)                         # (H, H)
    wk_t = wk.T.astype(dt)                                   # (H, H)
    wv_t = wv.T.astype(dt)                                   # (H, H)
    # NOTE: finite -1e30 keeps fully-masked rows NaN-free (uniform over masked
    # keys); the PyTorch reference would produce NaN for such rows (-inf everywhere).
    bias = jnp.where(mask == 0, jnp.float32(-1e30),
                     jnp.float32(0.0)).reshape(B, 1, S)      # (B, 1, S) f32

    sub = _sublane(dt)
    v5e = _is_v5e()
    # v6e/v7x: 256-wide MXU -> tq=256 / tkv=512; v5e: 128-wide MXU and 16 MiB
    # default scoped VMEM -> smaller tiles.  Sublane alignment is dtype-aware.
    tq = tq or _choose_tile(S, 128 if v5e else 256, sub)
    tkv = tkv or _choose_tile(S, 256 if v5e else 512, 128)
    ts = ts or _choose_tile(S, 256 if v5e else 512, sub)

    # Megacore balance (v7x has 2 TensorCores): keep >= 2 programs on the
    # parallel axes so one core isn't idle when B is small.
    while B * (S // tq) < 2 and tq > sub and (tq // 2) % sub == 0 and S % (tq // 2) == 0:
        tq //= 2

    assert S % tq == 0 and S % tkv == 0 and S % ts == 0

    # Pass 1: Q/K/V projection (hoisted out of the attention kv-loop).
    q, k, v = _qkv_projection(inputs, wq_t, wk_t, wv_t, ts=ts)
    # Pass 2: flash attention over the projected tensors.
    return _flash_attention(q, k, v, bias, tq=tq, tkv=tkv)


# --------------------------------------------------------------------------- #
# Reference + test
# --------------------------------------------------------------------------- #
def _reference(inputs, mask, wq, wk, wv):
    # Pure-JAX reference mirroring the PyTorch forward exactly.
    q = inputs @ wq.T
    k = inputs @ wk.T
    v = inputs @ wv.T
    scale = math.sqrt(inputs.shape[-1])
    attn = jnp.einsum("bqh,bkh->bqk", q, k) / scale
    attn = jnp.where(mask[:, None, :] == 0, -jnp.inf, attn)
    attn = jax.nn.softmax(attn, axis=-1)
    return jnp.einsum("bqk,bkh->bqh", attn, v)


if __name__ == "__main__":
    B, S, H = 2, 8, 32

    key = jax.random.PRNGKey(0)
    k_x, k_q, k_k, k_v, k_m = jax.random.split(key, 5)

    x = jax.random.normal(k_x, (B, S, H), dtype=jnp.float32)
    # Deterministic Linear weights (nn.Linear(H, H, bias=False) -> (H, H))
    bound = 1.0 / math.sqrt(H)
    wq = jax.random.uniform(k_q, (H, H), minval=-bound, maxval=bound, dtype=jnp.float32)
    wk = jax.random.uniform(k_k, (H, H), minval=-bound, maxval=bound, dtype=jnp.float32)
    wv = jax.random.uniform(k_v, (H, H), minval=-bound, maxval=bound, dtype=jnp.float32)
    # Binary mask (1 = attend, 0 = masked); ensure at least one valid key per row.
    mask = (jax.random.uniform(k_m, (B, S)) > 0.3).astype(jnp.float32)
    mask = mask.at[:, 0].set(1.0)

    out = self_attention(x, mask, wq, wk, wv)
    out = jax.block_until_ready(out)

    ref = _reference(x, mask, wq, wk, wv)
    assert out.shape == (B, S, H)
    assert jnp.allclose(out, ref, atol=1e-5, rtol=1e-5), "mismatch vs reference"

    print("KERNEL_OK")
</pallas_src>

<mosaic_0001>
module attributes {stable_mosaic.version = 11 : i64} {
  func.func @_qkv_proj_kernel(%arg0: i32, %arg1: i32, %arg2: memref<1x8x32xf32, #tpu.memory_space<vmem>>, %arg3: memref<32x32xf32, #tpu.memory_space<vmem>>, %arg4: memref<32x32xf32, #tpu.memory_space<vmem>>, %arg5: memref<32x32xf32, #tpu.memory_space<vmem>>, %arg6: memref<1x8x32xf32, #tpu.memory_space<vmem>>, %arg7: memref<1x8x32xf32, #tpu.memory_space<vmem>>, %arg8: memref<1x8x32xf32, #tpu.memory_space<vmem>>) attributes {dimension_semantics = [#tpu.dimension_semantics<parallel>, #tpu.dimension_semantics<parallel>], iteration_bounds = array<i64: 2, 1>, scalar_prefetch = 0 : i64, scratch_operands = 0 : i64, tpu.core_type = #tpu.core_type<tc>, window_params = [{transform_indices = @transform_0, window_bounds = array<i64: 1, 8, 32>}, {pipeline_mode = #tpu.pipeline_mode<synchronous>, transform_indices = @transform_1, window_bounds = array<i64: 32, 32>}, {pipeline_mode = #tpu.pipeline_mode<synchronous>, transform_indices = @transform_2, window_bounds = array<i64: 32, 32>}, {pipeline_mode = #tpu.pipeline_mode<synchronous>, transform_indices = @transform_3, window_bounds = array<i64: 32, 32>}, {transform_indices = @transform_4, window_bounds = array<i64: 1, 8, 32>}, {transform_indices = @transform_5, window_bounds = array<i64: 1, 8, 32>}, {transform_indices = @transform_6, window_bounds = array<i64: 1, 8, 32>}]} {
    %c0 = arith.constant 0 : index
    %c0_0 = arith.constant 0 : index
    %c0_1 = arith.constant 0 : index
    %0 = vector.load %arg2[%c0, %c0_0, %c0_1] : memref<1x8x32xf32, #tpu.memory_space<vmem>>, vector<1x8x32xf32>
    %1 = vector.shape_cast %0 : vector<1x8x32xf32> to vector<8x32xf32>
    %c0_2 = arith.constant 0 : index
    %c0_3 = arith.constant 0 : index
    %2 = vector.load %arg3[%c0_2, %c0_3] : memref<32x32xf32, #tpu.memory_space<vmem>>, vector<32x32xf32>
    %cst = arith.constant dense<0.000000e+00> : vector<8x32xf32>
    %3 = tpu.matmul %1, %2, %cst {dimension_numbers = #tpu.dot_dimension_numbers<[1], [0], [0], [1], [0, 0, 1, 1], [], []>} : vector<8x32xf32>, vector<32x32xf32>, vector<8x32xf32> -> vector<8x32xf32>
    %c0_4 = arith.constant 0 : index
    %c0_5 = arith.constant 0 : index
    %c0_6 = arith.constant 0 : index
    %4 = vector.load %arg6[%c0_4, %c0_5, %c0_6] : memref<1x8x32xf32, #tpu.memory_space<vmem>>, vector<1x8x32xf32>
    %5 = vector.shape_cast %4 : vector<1x8x32xf32> to vector<8x32xf32>
    %6 = vector.shape_cast %3 : vector<8x32xf32> to vector<1x8x32xf32>
    tpu.vector_store %arg6[%c0_4, %c0_5, %c0_6], %6 {strides = array<i32>} : memref<1x8x32xf32, #tpu.memory_space<vmem>>, vector<1x8x32xf32>,
    %c0_7 = arith.constant 0 : index
    %c0_8 = arith.constant 0 : index
    %7 = vector.load %arg4[%c0_7, %c0_8] : memref<32x32xf32, #tpu.memory_space<vmem>>, vector<32x32xf32>
    %cst_9 = arith.constant dense<0.000000e+00> : vector<8x32xf32>
    %8 = tpu.matmul %1, %7, %cst_9 {dimension_numbers = #tpu.dot_dimension_numbers<[1], [0], [0], [1], [0, 0, 1, 1], [], []>} : vector<8x32xf32>, vector<32x32xf32>, vector<8x32xf32> -> vector<8x32xf32>
    %c0_10 = arith.constant 0 : index
    %c0_11 = arith.constant 0 : index
    %c0_12 = arith.constant 0 : index
    %9 = vector.load %arg7[%c0_10, %c0_11, %c0_12] : memref<1x8x32xf32, #tpu.memory_space<vmem>>, vector<1x8x32xf32>
    %10 = vector.shape_cast %9 : vector<1x8x32xf32> to vector<8x32xf32>
    %11 = vector.shape_cast %8 : vector<8x32xf32> to vector<1x8x32xf32>
    tpu.vector_store %arg7[%c0_10, %c0_11, %c0_12], %11 {strides = array<i32>} : memref<1x8x32xf32, #tpu.memory_space<vmem>>, vector<1x8x32xf32>,
    %c0_13 = arith.constant 0 : index
    %c0_14 = arith.constant 0 : index
    %12 = vector.load %arg5[%c0_13, %c0_14] : memref<32x32xf32, #tpu.memory_space<vmem>>, vector<32x32xf32>
    %cst_15 = arith.constant dense<0.000000e+00> : vector<8x32xf32>
    %13 = tpu.matmul %1, %12, %cst_15 {dimension_numbers = #tpu.dot_dimension_numbers<[1], [0], [0], [1], [0, 0, 1, 1], [], []>} : vector<8x32xf32>, vector<32x32xf32>, vector<8x32xf32> -> vector<8x32xf32>
    %c0_16 = arith.constant 0 : index
    %c0_17 = arith.constant 0 : index
    %c0_18 = arith.constant 0 : index
    %14 = vector.load %arg8[%c0_16, %c0_17, %c0_18] : memref<1x8x32xf32, #tpu.memory_space<vmem>>, vector<1x8x32xf32>
    %15 = vector.shape_cast %14 : vector<1x8x32xf32> to vector<8x32xf32>
    %16 = vector.shape_cast %13 : vector<8x32xf32> to vector<1x8x32xf32>
    tpu.vector_store %arg8[%c0_16, %c0_17, %c0_18], %16 {strides = array<i32>} : memref<1x8x32xf32, #tpu.memory_space<vmem>>, vector<1x8x32xf32>,
    return
  }
  func.func @transform_0(%arg0: i32, %arg1: i32) -> (i32, i32, i32) {
    %c0_i32 = arith.constant 0 : i32
    %c0_i32_0 = arith.constant 0 : i32
    return %arg0, %arg1, %c0_i32 : i32, i32, i32
  }
  func.func @transform_1(%arg0: i32, %arg1: i32) -> (i32, i32) {
    %c0_i32 = arith.constant 0 : i32
    %c0_i32_0 = arith.constant 0 : i32
    %c0_i32_1 = arith.constant 0 : i32
    return %c0_i32, %c0_i32_0 : i32, i32
  }
  func.func @transform_2(%arg0: i32, %arg1: i32) -> (i32, i32) {
    %c0_i32 = arith.constant 0 : i32
    %c0_i32_0 = arith.constant 0 : i32
    %c0_i32_1 = arith.constant 0 : i32
    return %c0_i32, %c0_i32_0 : i32, i32
  }
  func.func @transform_3(%arg0: i32, %arg1: i32) -> (i32, i32) {
    %c0_i32 = arith.constant 0 : i32
    %c0_i32_0 = arith.constant 0 : i32
    %c0_i32_1 = arith.constant 0 : i32
    return %c0_i32, %c0_i32_0 : i32, i32
  }
  func.func @transform_4(%arg0: i32, %arg1: i32) -> (i32, i32, i32) {
    %c0_i32 = arith.constant 0 : i32
    %c0_i32_0 = arith.constant 0 : i32
    return %arg0, %arg1, %c0_i32 : i32, i32, i32
  }
  func.func @transform_5(%arg0: i32, %arg1: i32) -> (i32, i32, i32) {
    %c0_i32 = arith.constant 0 : i32
    %c0_i32_0 = arith.constant 0 : i32
    return %arg0, %arg1, %c0_i32 : i32, i32, i32
  }
  func.func @transform_6(%arg0: i32, %arg1: i32) -> (i32, i32, i32) {
    %c0_i32 = arith.constant 0 : i32
    %c0_i32_0 = arith.constant 0 : i32
    return %arg0, %arg1, %c0_i32 : i32, i32, i32
  }
}

</mosaic_0001>

<llo_original>
// kernel: tpu_custom_call.1
$region0: #{tpu_custom_call.1}
  #allocation0 [shape = 'u32[]', space=smem, size = 0x4, offset = 0x4, fixed_abs, tag = 'smem constant byte address 0x4 - core index']
  #allocation1 [shape = 'u32[144,128]{1,0:T(1,128)}', space=vmem, size = 0x12000, scoped, tag = 'internal scratch']
  %s0 = inlined_call_operand.hbm [shape: f32[2,8,32], index: 0, kind: input, shape index: {}]
  %s1 = inlined_call_operand.hbm [shape: f32[32,32], index: 1, kind: input, shape index: {}]
  %s2 = inlined_call_operand.hbm [shape: f32[32,32], index: 2, kind: input, shape index: {}]
  %s3 = inlined_call_operand.hbm [shape: f32[32,32], index: 3, kind: input, shape index: {}]
  %s4 = inlined_call_operand.hbm [shape: f32[2,8,32], index: 4, kind: output, shape index: {0}]
  %s5 = inlined_call_operand.hbm [shape: f32[2,8,32], index: 5, kind: output, shape index: {1}]
  %s6 = inlined_call_operand.hbm [shape: f32[2,8,32], index: 6, kind: output, shape index: {2}]
  %7 = xla_tuple %s4, %s5, %s6
  %s8 = sld [smem:[#allocation0]]
  $region81: #{tpu_custom_call.1} parent=0
    _
  %s10 = ssub.s32 1, %s8
  %s11 = scalar_select 0, %s10, %s8
  $region1: #{tpu_custom_call.1} parent=0
    #allocation2 [shape = 'u8[8192]{0}', space=vmem, size = 0x2000, scoped, tag = 'input window, operand 0']
    #allocation3 [shape = 's32[2]{0}', space=sflag, size = 0x8, scoped, tag = 'scoped memory for tpu_custom_call.1']
    #allocation4 [shape = 's32[2]{0}', space=sflag, size = 0x8, scoped, tag = 'scoped memory for tpu_custom_call.1']
    #allocation5 [shape = 'u8[16384]{0}', space=vmem, size = 0x4000, scoped, tag = 'input window, operand 1, single buffered']
    #allocation6 [shape = 's32[1]{0}', space=sflag, size = 0x4, scoped, tag = 'scoped memory for tpu_custom_call.1']
    #allocation7 [shape = 'u8[16384]{0}', space=vmem, size = 0x4000, scoped, tag = 'input window, operand 2, single buffered']
    #allocation8 [shape = 'u8[16384]{0}', space=vmem, size = 0x4000, scoped, tag = 'input window, operand 3, single buffered']
    #allocation9 [shape = 's32[1]{0}', space=sflag, size = 0x4, scoped, tag = 'scoped memory for tpu_custom_call.1']
    #allocation10 [shape = 'u8[8192]{0}', space=vmem, size = 0x2000, scoped, tag = 'output window, operand 0']
    #allocation11 [shape = 'u8[8192]{0}', space=vmem, size = 0x2000, scoped, tag = 'output window, operand 1']
    #allocation12 [shape = 's32[2]{0}', space=sflag, size = 0x8, scoped, tag = 'scoped memory for tpu_custom_call.1']
    #allocation13 [shape = 'u8[8192]{0}', space=vmem, size = 0x2000, scoped, tag = 'output window, operand 2']
    %12 = vsyncpa [#allocation3], 0
    %s13 = scalar_lea.sflag [#allocation3], 1
    %14 = vsyncpa %s13, 0
    %15 = vsyncpa [#allocation6], 0
    %16 = vsyncpa [#allocation9], 0
    %17 = vsyncpa [#allocation4], 0
    %s18 = scalar_lea.sflag [#allocation4], 1
    %19 = vsyncpa %s18, 0
    %20 = vsyncpa [#allocation12], 0
    %s21 = scalar_lea.sflag [#allocation12], 1
    %22 = vsyncpa %s21, 0
    loop: start=0, step=1, limit=4
    $region2: #{tpu_custom_call.1} parent=1 // loop_pre_header
      _
    $region3: #{tpu_custom_call.1} parent=1 // loop_header
      %s24 = sphi 0, %s28
      %p25 = scmp.ge.s32.totalorder %s24, 4
      %s31 = sphi 0, %s43
      %s32 = sphi 0, %s39
      %s33 = sphi 0, %s31
      %s34 = sphi 0, %s32
      %s35 = sphi 0, %s33
      %s36 = sphi 0, %s34
      %s48 = sphi 0, %s50
      %s51 = sphi 0, %s48
      %s52 = sphi 0, %s51
      %s68 = sphi 0, %s52
      %s72 = sphi 0, %s72
      %s74 = sphi 0, %s72
      %s75 = sphi 0, %s74
      %s89 = sphi 0, %s75
      %s93 = sphi 0, %s93
      %s95 = sphi 0, %s93
      %s96 = sphi 0, %s95
      %s110 = sphi 0, %s96
      %s114 = sphi 0, %s114
      %s116 = sphi 0, %s114
      %s117 = sphi 0, %s116
      %s131 = sphi 0, %s117
      %s139 = sphi 0, %s141
      %s142 = sphi 0, %s139
      %s143 = sphi 0, %s142
      %s159 = sphi 0, %s143
      %s167 = sphi 0, %s169
      %s170 = sphi 0, %s167
      %s171 = sphi 0, %s170
      %s187 = sphi 0, %s171
      %s195 = sphi 0, %s197
      %s198 = sphi 0, %s195
      %s199 = sphi 0, %s198
      %s215 = sphi 0, %s199
    $region4: #{tpu_custom_call.1} parent=1 // loop_header_branch
      %27 = sbr.rel (%p25) target = $region8
    $region5: #{tpu_custom_call.1} parent=1 // loop_body
      %s29 = ssub.s32 %s24, 1
      %s30 = ssub.s32 %s24, 2
      %s37 = sadd.s32 1, %s32
      %p38 = scmp.ge.s32.totalorder %s37, 1
      %s39 = scalar_select %p38, 0, %s37
      %s40 = sadd.s32 1, %s31
      %s41 = scalar_select %p38, %s40, %s31
      %p42 = scmp.ge.s32.totalorder %s41, 2
      %s43 = scalar_select %p42, 0, %s41
      %s44 = ssub.s32 %s31, %s43
      %s45 = ssub.s32 %s32, %s39
      %s46 = sor.u32 %s44, %s45
      %p47 = scmp.eq.s32.totalorder %s46, 0
      %s49 = sadd.s32 %s48, 1
      %s50 = scalar_select %p47, %s48, %s49
      %p53 = pneg %p47
      %p54 = scmp.eq.s32.totalorder %s24, 1
      %p55 = por %p53, %p54
      %p56 = scmp.ne.s32.totalorder %s48, %s51
      %p57 = scmp.eq.s32.totalorder %s24, 0
      %p58 = por %p56, %p57
      %p59 = scmp.ne.s32.totalorder %s48, %s51
      %p60 = scmp.eq.s32.totalorder %s29, 1
      %p61 = por %p59, %p60
      %p62 = scmp.ne.s32.totalorder %s51, %s52
      %p63 = scmp.eq.s32.totalorder %s29, 0
      %p64 = por %p62, %p63
      %p65 = scmp.ne.s32.totalorder %s51, %s52
      %p66 = scmp.eq.s32.totalorder %s30, 1
      %p67 = por %p65, %p66
      %p69 = scmp.ne.s32.totalorder %s52, %s68
      %p70 = scmp.eq.s32.totalorder %s30, 0
      %p71 = por %p69, %p70
      %s73 = sadd.s32 %s72, 1
      %p76 = scmp.eq.s32.totalorder %s24, 1
      %p77 = scmp.ne.s32.totalorder %s72, %s74
      %p78 = scmp.eq.s32.totalorder %s24, 0
      %p79 = por %p77, %p78
      %p80 = scmp.ne.s32.totalorder %s72, %s74
      %p81 = scmp.eq.s32.totalorder %s29, 1
      %p82 = por %p80, %p81
      %p83 = scmp.ne.s32.totalorder %s74, %s75
      %p84 = scmp.eq.s32.totalorder %s29, 0
      %p85 = por %p83, %p84
      %p86 = scmp.ne.s32.totalorder %s74, %s75
      %p87 = scmp.eq.s32.totalorder %s30, 1
      %p88 = por %p86, %p87
      %p90 = scmp.ne.s32.totalorder %s75, %s89
      %p91 = scmp.eq.s32.totalorder %s30, 0
      %p92 = por %p90, %p91
      %s94 = sadd.s32 %s93, 1
      %p97 = scmp.eq.s32.totalorder %s24, 1
      %p98 = scmp.ne.s32.totalorder %s93, %s95
      %p99 = scmp.eq.s32.totalorder %s24, 0
      %p100 = por %p98, %p99
      %p101 = scmp.ne.s32.totalorder %s93, %s95
      %p102 = scmp.eq.s32.totalorder %s29, 1
      %p103 = por %p101, %p102
      %p104 = scmp.ne.s32.totalorder %s95, %s96
      %p105 = scmp.eq.s32.totalorder %s29, 0
      %p106 = por %p104, %p105
      %p107 = scmp.ne.s32.totalorder %s95, %s96
      %p108 = scmp.eq.s32.totalorder %s30, 1
      %p109 = por %p107, %p108
      %p111 = scmp.ne.s32.totalorder %s96, %s110
      %p112 = scmp.eq.s32.totalorder %s30, 0
      %p113 = por %p111, %p112
      %s115 = sadd.s32 %s114, 1
      %p118 = scmp.eq.s32.totalorder %s24, 1
      %p119 = scmp.ne.s32.totalorder %s114, %s116
      %p120 = scmp.eq.s32.totalorder %s24, 0
      %p121 = por %p119, %p120
      %p122 = scmp.ne.s32.totalorder %s114, %s116
      %p123 = scmp.eq.s32.totalorder %s29, 1
      %p124 = por %p122, %p123
      %p125 = scmp.ne.s32.totalorder %s116, %s117
      %p126 = scmp.eq.s32.totalorder %s29, 0
      %p127 = por %p125, %p126
      %p128 = scmp.ne.s32.totalorder %s116, %s117
      %p129 = scmp.eq.s32.totalorder %s30, 1
      %p130 = por %p128, %p129
      %p132 = scmp.ne.s32.totalorder %s117, %s131
      %p133 = scmp.eq.s32.totalorder %s30, 0
      %p134 = por %p132, %p133
      %s135 = ssub.s32 %s31, %s43
      %s136 = ssub.s32 %s32, %s39
      %s137 = sor.u32 %s135, %s136
      %p138 = scmp.eq.s32.totalorder %s137, 0
      %s140 = sadd.s32 %s139, 1
      %s141 = scalar_select %p138, %s139, %s140
      %p144 = pneg %p138
      %p145 = scmp.eq.s32.totalorder %s24, 1
      %p146 = por %p144, %p145
      %p147 = scmp.ne.s32.totalorder %s139, %s142
      %p148 = scmp.eq.s32.totalorder %s24, 0
      %p149 = por %p147, %p148
      %p150 = scmp.ne.s32.totalorder %s139, %s142
      %p151 = scmp.eq.s32.totalorder %s29, 1
      %p152 = por %p150, %p151
      %p153 = scmp.ne.s32.totalorder %s142, %s143
      %p154 = scmp.eq.s32.totalorder %s29, 0
      %p155 = por %p153, %p154
      %p156 = scmp.ne.s32.totalorder %s142, %s143
      %p157 = scmp.eq.s32.totalorder %s30, 1
      %p158 = por %p156, %p157
      %p160 = scmp.ne.s32.totalorder %s143, %s159
      %p161 = scmp.eq.s32.totalorder %s30, 0
      %p162 = por %p160, %p161
      %s163 = ssub.s32 %s31, %s43
      %s164 = ssub.s32 %s32, %s39
      %s165 = sor.u32 %s163, %s164
      %p166 = scmp.eq.s32.totalorder %s165, 0
      %s168 = sadd.s32 %s167, 1
      %s169 = scalar_select %p166, %s167, %s168
      %p172 = pneg %p166
      %p173 = scmp.eq.s32.totalorder %s24, 1
      %p174 = por %p172, %p173
      %p175 = scmp.ne.s32.totalorder %s167, %s170
      %p176 = scmp.eq.s32.totalorder %s24, 0
      %p177 = por %p175, %p176
      %p178 = scmp.ne.s32.totalorder %s167, %s170
      %p179 = scmp.eq.s32.totalorder %s29, 1
      %p180 = por %p178, %p179
      %p181 = scmp.ne.s32.totalorder %s170, %s171
      %p182 = scmp.eq.s32.totalorder %s29, 0
      %p183 = por %p181, %p182
      %p184 = scmp.ne.s32.totalorder %s170, %s171
      %p185 = scmp.eq.s32.totalorder %s30, 1
      %p186 = por %p184, %p185
      %p188 = scmp.ne.s32.totalorder %s171, %s187
      %p189 = scmp.eq.s32.totalorder %s30, 0
      %p190 = por %p188, %p189
      %s191 = ssub.s32 %s31, %s43
      %s192 = ssub.s32 %s32, %s39
      %s193 = sor.u32 %s191, %s192
      %p194 = scmp.eq.s32.totalorder %s193, 0
      %s196 = sadd.s32 %s195, 1
      %s197 = scalar_select %p194, %s195, %s196
      %p200 = pneg %p194
      %p201 = scmp.eq.s32.totalorder %s24, 1
      %p202 = por %p200, %p201
      %p203 = scmp.ne.s32.totalorder %s195, %s198
      %p204 = scmp.eq.s32.totalorder %s24, 0
      %p205 = por %p203, %p204
      %p206 = scmp.ne.s32.totalorder %s195, %s198
      %p207 = scmp.eq.s32.totalorder %s29, 1
      %p208 = por %p206, %p207
      %p209 = scmp.ne.s32.totalorder %s198, %s199
      %p210 = scmp.eq.s32.totalorder %s29, 0
      %p211 = por %p209, %p210
      %p212 = scmp.ne.s32.totalorder %s198, %s199
      %p213 = scmp.eq.s32.totalorder %s30, 1
      %p214 = por %p212, %p213
      %p216 = scmp.ne.s32.totalorder %s199, %s215
      %p217 = scmp.eq.s32.totalorder %s30, 0
      %p218 = por %p216, %p217
      %p219 = scmp.le.s32.totalorder 1, %s24
      %p220 = scmp.lt.s32.totalorder %s24, 3
      %p221 = pnand %p219, %p220
      %p222 = pneg %p221
      // Predicated region
      $region9: #{tpu_custom_call.1} parent=5 // pred_check
        _
      $region10: #{tpu_custom_call.1} parent=5 // pred_check_branch
        %224 = sbr.rel (%p221) target = $region12
      $region11: #{tpu_custom_call.1} parent=5 // pred_region
        %s225 = ssub.s32 %s24, 1
        // Predicated region
        $region13: #{tpu_custom_call.1} parent=11 // pred_check
          %p226 = pneg %p85
        $region14: #{tpu_custom_call.1} parent=11 // pred_check_branch
          %228 = sbr.rel (%p226) target = $region16
        $region15: #{tpu_custom_call.1} parent=11 // pred_region
          %s230 = ssub.s32 512, 512
          %231 = vsyncadd [#allocation6], %s230
          %s232 = sshll.u32 [#allocation5], 4
          %s233 = int_to_ptr.vmem [resolvable:$true] %s232
          %238 = dma.hbm_to_vmem [thread:$0]  %s1, 512, %s233, [#allocation6], 128, 128, 8
        $region16: #{tpu_custom_call.1} parent=11 // pred_fallthru
          _
        // Predicated region
        $region17: #{tpu_custom_call.1} parent=11 // pred_check
          %p239 = pneg %p106
        $region18: #{tpu_custom_call.1} parent=11 // pred_check_branch
          %241 = sbr.rel (%p239) target = $region20
        $region19: #{tpu_custom_call.1} parent=11 // pred_region
          %s243 = ssub.s32 512, 512
          %244 = vsyncadd [#allocation6], %s243
          %s245 = sshll.u32 [#allocation7], 4
          %s246 = int_to_ptr.vmem [resolvable:$true] %s245
          %251 = dma.hbm_to_vmem [thread:$0]  %s2, 512, %s246, [#allocation6], 128, 128, 8
        $region20: #{tpu_custom_call.1} parent=11 // pred_fallthru
          _
        // Predicated region
        $region21: #{tpu_custom_call.1} parent=11 // pred_check
          %p252 = pneg %p127
        $region22: #{tpu_custom_call.1} parent=11 // pred_check_branch
          %254 = sbr.rel (%p252) target = $region24
        $region23: #{tpu_custom_call.1} parent=11 // pred_region
          %s256 = ssub.s32 512, 512
          %257 = vsyncadd [#allocation9], %s256
          %s258 = sshll.u32 [#allocation8], 4
          %s259 = int_to_ptr.vmem [resolvable:$true] %s258
          %264 = dma.hbm_to_vmem [thread:$0]  %s3, 512, %s259, [#allocation9], 128, 128, 8
        $region24: #{tpu_custom_call.1} parent=11 // pred_fallthru
          _
      $region12: #{tpu_custom_call.1} parent=5 // pred_fallthru
        _
      %p265 = scmp.lt.s32.totalorder %s24, 2
      // Predicated region
      $region25: #{tpu_custom_call.1} parent=5 // pred_check
        %p266 = pneg %p265
      $region26: #{tpu_custom_call.1} parent=5 // pred_check_branch
        %268 = sbr.rel (%p266) target = $region28
      $region27: #{tpu_custom_call.1} parent=5 // pred_region
        // Predicated region
        $region29: #{tpu_custom_call.1} parent=27 // pred_check
          %p269 = pneg %p58
        $region30: #{tpu_custom_call.1} parent=27 // pred_check_branch
          %271 = sbr.rel (%p269) target = $region32
        $region31: #{tpu_custom_call.1} parent=27 // pred_region
          %s272 = sand.u32 %s48, 1
          %s273 = scalar_lea.sflag [#allocation3], %s272
          %s274 = sand.u32 %s48, 1
          %s275 = smul.addr %s274, 8
          %s276 = scalar_lea.vmem [#allocation2], %s275
          %s278 = ssub.s32 128, 128
          %279 = vsyncadd %s273, %s278
          %s280 = sadd.s32 %s32, %s31
          %s281 = smul.addr %s280, 128
          %s282 = scalar_lea.hbm %s0, %s281
          %s284 = sshll.u32 %s276, 4
          %s285 = int_to_ptr.vmem [resolvable:$true] %s284
          %287 = dma.hbm_to_vmem [thread:$0]  %s282, 128, %s285, %s273
        $region32: #{tpu_custom_call.1} parent=27 // pred_fallthru
          _
      $region28: #{tpu_custom_call.1} parent=5 // pred_fallthru
        _
      %p288 = scmp.le.s32.totalorder 1, %s24
      %p289 = scmp.lt.s32.totalorder %s24, 3
      %p290 = pnand %p288, %p289
      %p291 = pneg %p290
      // Predicated region
      $region33: #{tpu_custom_call.1} parent=5 // pred_check
        _
      $region34: #{tpu_custom_call.1} parent=5 // pred_check_branch
        %293 = sbr.rel (%p290) target = $region36
      $region35: #{tpu_custom_call.1} parent=5 // pred_region
        %s294 = ssub.s32 %s24, 1
        %s295 = sand.u32 %s51, 1
        %s296 = scalar_lea.sflag [#allocation3], %s295
        %s297 = sand.u32 %s51, 1
        %s298 = smul.addr %s297, 8
        %s299 = scalar_lea.vmem [#allocation2], %s298
        // Predicated region
        $region37: #{tpu_custom_call.1} parent=35 // pred_check
          %p300 = pneg %p64
        $region38: #{tpu_custom_call.1} parent=35 // pred_check_branch
          %302 = sbr.rel (%p300) target = $region40
        $region39: #{tpu_custom_call.1} parent=35 // pred_region
          %303 = dma.done %s296, 128
        $region40: #{tpu_custom_call.1} parent=35 // pred_fallthru
          _
        // Predicated region
        $region41: #{tpu_custom_call.1} parent=35 // pred_check
          %p304 = pneg %p85
        $region42: #{tpu_custom_call.1} parent=35 // pred_check_branch
          %306 = sbr.rel (%p304) target = $region44
        $region43: #{tpu_custom_call.1} parent=35 // pred_region
          %307 = dma.done [#allocation6], 512
        $region44: #{tpu_custom_call.1} parent=35 // pred_fallthru
          _
        // Predicated region
        $region45: #{tpu_custom_call.1} parent=35 // pred_check
          %p308 = pneg %p106
        $region46: #{tpu_custom_call.1} parent=35 // pred_check_branch
          %310 = sbr.rel (%p308) target = $region48
        $region47: #{tpu_custom_call.1} parent=35 // pred_region
          %311 = dma.done [#allocation6], 512
        $region48: #{tpu_custom_call.1} parent=35 // pred_fallthru
          _
        // Predicated region
        $region49: #{tpu_custom_call.1} parent=35 // pred_check
          %p312 = pneg %p127
        $region50: #{tpu_custom_call.1} parent=35 // pred_check_branch
          %314 = sbr.rel (%p312) target = $region52
        $region51: #{tpu_custom_call.1} parent=35 // pred_region
          %315 = dma.done [#allocation9], 512
        $region52: #{tpu_custom_call.1} parent=35 // pred_fallthru
          _
        %s316 = sand.u32 %s51, 1
        %s317 = scalar_lea.sflag [#allocation3], %s316
        %s318 = sand.u32 %s51, 1
        %s319 = smul.addr %s318, 8
        %s320 = scalar_lea.vmem [#allocation2], %s319
        %p321 = pneg %p64
        %p322 = pneg %p61
        %p323 = pneg %p85
        %p324 = pneg %p82
        %p325 = pneg %p106
        %p326 = pneg %p103
        %p327 = pneg %p127
        %p328 = pneg %p124
        %p329 = pneg %p155
        %p330 = pneg %p152
        %s331 = sand.u32 %s142, 1
        %s332 = scalar_lea.sflag [#allocation4], %s331
        %s333 = sand.u32 %s142, 1
        %s334 = smul.addr %s333, 8
        %s335 = scalar_lea.vmem [#allocation10], %s334
        %p336 = pneg %p183
        %p337 = pneg %p180
        %s338 = sand.u32 %s29, 1
        %s339 = scalar_lea.sflag [#allocation12], %s338
        %s340 = sand.u32 %s170, 1
        %s341 = smul.addr %s340, 8
        %s342 = scalar_lea.vmem [#allocation11], %s341
        %p343 = pneg %p211
        %p344 = pneg %p208
        %s345 = sand.u32 %s29, 1
        %s346 = scalar_lea.sflag [#allocation12], %s345
        %s347 = sand.u32 %s198, 1
        %s348 = smul.addr %s347, 8
        %s349 = scalar_lea.vmem [#allocation13], %s348
        %v350 = vld [vmem:[%s299] sm:$0xff]
        %v351 = vld [vmem:[#allocation5] sm:$0xff]
        %v352 = vld [vmem:[#allocation5 + $0x8] sm:$0xff]
        %v353 = vld [vmem:[#allocation5 + $0x10] sm:$0xff]
        %v354 = vld [vmem:[#allocation5 + $0x18] sm:$0xff]
        %vm355 = vcmask 261120
        %v357 = vsel %vm355, %v350, 0
        %359 = vmatprep.subr.mxu0 0.0
        %360 = vmatpush1.msra.mxu0 0.0
        %361 = vmatprep.subr.mxu0 0.0
        %362 = vmatpush1.msra.mxu0 0.0
        %363 = vmatprep.subr.mxu0 0.0
        %364 = vmatpush1.msra.mxu0 0.0
        %365 = vmatprep.subr.mxu0 0.0
        %366 = vmatpush1.msra.mxu0 0.0
        %367 = vmatprep.subr.mxu0 0.0
        %368 = vmatpush1.msra.mxu0 0.0
        %369 = vmatprep.subr.mxu0 0.0
        %370 = vmatpush1.msra.mxu0 0.0
        %371 = vmatprep.subr.mxu0 0.0
        %372 = vmatpush1.msra.mxu0 0.0
        %373 = vmatprep.subr.mxu0 0.0
        %374 = vmatpush1.msra.mxu0 0.0
        %375 = vmatprep.subr.mxu0 0.0
        %376 = vmatpush1.msra.mxu0 0.0
        %377 = vmatprep.subr.mxu0 0.0
        %378 = vmatpush1.msra.mxu0 0.0
        %379 = vmatprep.subr.mxu0 0.0
        %380 = vmatpush1.msra.mxu0 0.0
        %381 = vmatprep.subr.mxu0 0.0
        %382 = vmatpush1.msra.mxu0 0.0
        %383 = vmatprep.subr.mxu0 0.0
        %384 = vmatpush1.msra.mxu0 %v354
        %385 = vmatprep.subr.mxu0 0.0
        %386 = vmatpush1.msra.mxu0 %v353
        %387 = vmatprep.subr.mxu0 0.0
        %388 = vmatpush1.msra.mxu0 %v352
        %389 = vmatprep.subr.mxu0 0.0
        %390 = vmatpush1.msra.mxu0 %v351
        %391 = vmatprep.subr.mxu0 0.0
        %392 = vmatpush2.msra.mxu0 0.0
        %393 = vmatprep.subr.mxu0 0.0
        %394 = vmatpush2.msra.mxu0 0.0
        %395 = vmatprep.subr.mxu0 0.0
        %396 = vmatpush2.msra.mxu0 0.0
        %397 = vmatprep.subr.mxu0 0.0
        %398 = vmatpush2.msra.mxu0 0.0
        %399 = vmatprep.subr.mxu0 0.0
        %400 = vmatpush2.msra.mxu0 0.0
        %401 = vmatprep.subr.mxu0 0.0
        %402 = vmatpush2.msra.mxu0 0.0
        %403 = vmatprep.subr.mxu0 0.0
        %404 = vmatpush2.msra.mxu0 0.0
        %405 = vmatprep.subr.mxu0 0.0
        %406 = vmatpush2.msra.mxu0 0.0
        %407 = vmatprep.subr.mxu0 0.0
        %408 = vmatpush2.msra.mxu0 0.0
        %409 = vmatprep.subr.mxu0 0.0
        %410 = vmatpush2.msra.mxu0 0.0
        %411 = vmatprep.subr.mxu0 0.0
        %412 = vmatpush2.msra.mxu0 0.0
        %413 = vmatprep.subr.mxu0 0.0
        %414 = vmatpush2.msra.mxu0 0.0
        %415 = vmatprep.subr.mxu0 0.0
        %416 = vmatpush2.msra.mxu0 0.0
        %417 = vmatprep.subr.mxu0 0.0
        %418 = vmatpush2.msra.mxu0 0.0
        %419 = vmatprep.subr.mxu0 0.0
        %420 = vmatpush2.msra.mxu0 0.0
        %421 = vmatprep.subr.mxu0 0.0
        %422 = vmatpush2.msra.mxu0 0.0
        %423 = vmatprep.mubr.f32.mxu0 0.0
        %424 = vmatmul.mubr.f32.gmra.mxu0 %v357
        %v425 = vpop.f32.mrf.mxu0
        %v426 = vadd.f32 0.0, %v425
        %v427 = vpop.f32.mrf.mxu0
        %428 = vdwg.mxu0
        %429 = vst.msk [vmem:[%s335] sm:$0xff] %vm355, %v426
        %v430 = vld [vmem:[#allocation7] sm:$0xff]
        %v431 = vld [vmem:[#allocation7 + $0x8] sm:$0xff]
        %v432 = vld [vmem:[#allocation7 + $0x10] sm:$0xff]
        %v433 = vld [vmem:[#allocation7 + $0x18] sm:$0xff]
        %434 = vmatprep.subr.mxu0 0.0
        %435 = vmatpush1.msra.mxu0 0.0
        %436 = vmatprep.subr.mxu0 0.0
        %437 = vmatpush1.msra.mxu0 0.0
        %438 = vmatprep.subr.mxu0 0.0
        %439 = vmatpush1.msra.mxu0 0.0
        %440 = vmatprep.subr.mxu0 0.0
        %441 = vmatpush1.msra.mxu0 0.0
        %442 = vmatprep.subr.mxu0 0.0
        %443 = vmatpush1.msra.mxu0 0.0
        %444 = vmatprep.subr.mxu0 0.0
        %445 = vmatpush1.msra.mxu0 0.0
        %446 = vmatprep.subr.mxu0 0.0
        %447 = vmatpush1.msra.mxu0 0.0
        %448 = vmatprep.subr.mxu0 0.0
        %449 = vmatpush1.msra.mxu0 0.0
        %450 = vmatprep.subr.mxu0 0.0
        %451 = vmatpush1.msra.mxu0 0.0
        %452 = vmatprep.subr.mxu0 0.0
        %453 = vmatpush1.msra.mxu0 0.0
        %454 = vmatprep.subr.mxu0 0.0
        %455 = vmatpush1.msra.mxu0 0.0
        %456 = vmatprep.subr.mxu0 0.0
        %457 = vmatpush1.msra.mxu0 0.0
        %458 = vmatprep.subr.mxu0 0.0
        %459 = vmatpush1.msra.mxu0 %v433
        %460 = vmatprep.subr.mxu0 0.0
        %461 = vmatpush1.msra.mxu0 %v432
        %462 = vmatprep.subr.mxu0 0.0
        %463 = vmatpush1.msra.mxu0 %v431
        %464 = vmatprep.subr.mxu0 0.0
        %465 = vmatpush1.msra.mxu0 %v430
        %466 = vmatprep.subr.mxu0 0.0
        %467 = vmatpush2.msra.mxu0 0.0
        %468 = vmatprep.subr.mxu0 0.0
        %469 = vmatpush2.msra.mxu0 0.0
        %470 = vmatprep.subr.mxu0 0.0
        %471 = vmatpush2.msra.mxu0 0.0
        %472 = vmatprep.subr.mxu0 0.0
        %473 = vmatpush2.msra.mxu0 0.0
        %474 = vmatprep.subr.mxu0 0.0
        %475 = vmatpush2.msra.mxu0 0.0
        %476 = vmatprep.subr.mxu0 0.0
        %477 = vmatpush2.msra.mxu0 0.0
        %478 = vmatprep.subr.mxu0 0.0
        %479 = vmatpush2.msra.mxu0 0.0
        %480 = vmatprep.subr.mxu0 0.0
        %481 = vmatpush2.msra.mxu0 0.0
        %482 = vmatprep.subr.mxu0 0.0
        %483 = vmatpush2.msra.mxu0 0.0
        %484 = vmatprep.subr.mxu0 0.0
        %485 = vmatpush2.msra.mxu0 0.0
        %486 = vmatprep.subr.mxu0 0.0
        %487 = vmatpush2.msra.mxu0 0.0
        %488 = vmatprep.subr.mxu0 0.0
        %489 = vmatpush2.msra.mxu0 0.0
        %490 = vmatprep.subr.mxu0 0.0
        %491 = vmatpush2.msra.mxu0 0.0
        %492 = vmatprep.subr.mxu0 0.0
        %493 = vmatpush2.msra.mxu0 0.0
        %494 = vmatprep.subr.mxu0 0.0
        %495 = vmatpush2.msra.mxu0 0.0
        %496 = vmatprep.subr.mxu0 0.0
        %497 = vmatpush2.msra.mxu0 0.0
        %498 = vmatprep.mubr.f32.mxu0 0.0
        %499 = vmatmul.mubr.f32.gmra.mxu0 %v357
        %v500 = vpop.f32.mrf.mxu0
        %v501 = vadd.f32 0.0, %v500
        %v502 = vpop.f32.mrf.mxu0
        %503 = vdwg.mxu0
        %504 = vst.msk [vmem:[%s342] sm:$0xff] %vm355, %v501
        %v505 = vld [vmem:[#allocation8] sm:$0xff]
        %v506 = vld [vmem:[#allocation8 + $0x8] sm:$0xff]
        %v507 = vld [vmem:[#allocation8 + $0x10] sm:$0xff]
        %v508 = vld [vmem:[#allocation8 + $0x18] sm:$0xff]
        %509 = vmatprep.subr.mxu0 0.0
        %510 = vmatpush1.msra.mxu0 0.0
        %511 = vmatprep.subr.mxu0 0.0
        %512 = vmatpush1.msra.mxu0 0.0
        %513 = vmatprep.subr.mxu0 0.0
        %514 = vmatpush1.msra.mxu0 0.0
        %515 = vmatprep.subr.mxu0 0.0
        %516 = vmatpush1.msra.mxu0 0.0
        %517 = vmatprep.subr.mxu0 0.0
        %518 = vmatpush1.msra.mxu0 0.0
        %519 = vmatprep.subr.mxu0 0.0
        %520 = vmatpush1.msra.mxu0 0.0
        %521 = vmatprep.subr.mxu0 0.0
        %522 = vmatpush1.msra.mxu0 0.0
        %523 = vmatprep.subr.mxu0 0.0
        %524 = vmatpush1.msra.mxu0 0.0
        %525 = vmatprep.subr.mxu0 0.0
        %526 = vmatpush1.msra.mxu0 0.0
        %527 = vmatprep.subr.mxu0 0.0
        %528 = vmatpush1.msra.mxu0 0.0
        %529 = vmatprep.subr.mxu0 0.0
        %530 = vmatpush1.msra.mxu0 0.0
        %531 = vmatprep.subr.mxu0 0.0
        %532 = vmatpush1.msra.mxu0 0.0
        %533 = vmatprep.subr.mxu0 0.0
        %534 = vmatpush1.msra.mxu0 %v508
        %535 = vmatprep.subr.mxu0 0.0
        %536 = vmatpush1.msra.mxu0 %v507
        %537 = vmatprep.subr.mxu0 0.0
        %538 = vmatpush1.msra.mxu0 %v506
        %539 = vmatprep.subr.mxu0 0.0
        %540 = vmatpush1.msra.mxu0 %v505
        %541 = vmatprep.subr.mxu0 0.0
        %542 = vmatpush2.msra.mxu0 0.0
        %543 = vmatprep.subr.mxu0 0.0
        %544 = vmatpush2.msra.mxu0 0.0
        %545 = vmatprep.subr.mxu0 0.0
        %546 = vmatpush2.msra.mxu0 0.0
        %547 = vmatprep.subr.mxu0 0.0
        %548 = vmatpush2.msra.mxu0 0.0
        %549 = vmatprep.subr.mxu0 0.0
        %550 = vmatpush2.msra.mxu0 0.0
        %551 = vmatprep.subr.mxu0 0.0
        %552 = vmatpush2.msra.mxu0 0.0
        %553 = vmatprep.subr.mxu0 0.0
        %554 = vmatpush2.msra.mxu0 0.0
        %555 = vmatprep.subr.mxu0 0.0
        %556 = vmatpush2.msra.mxu0 0.0
        %557 = vmatprep.subr.mxu0 0.0
        %558 = vmatpush2.msra.mxu0 0.0
        %559 = vmatprep.subr.mxu0 0.0
        %560 = vmatpush2.msra.mxu0 0.0
        %561 = vmatprep.subr.mxu0 0.0
        %562 = vmatpush2.msra.mxu0 0.0
        %563 = vmatprep.subr.mxu0 0.0
        %564 = vmatpush2.msra.mxu0 0.0
        %565 = vmatprep.subr.mxu0 0.0
        %566 = vmatpush2.msra.mxu0 0.0
        %567 = vmatprep.subr.mxu0 0.0
        %568 = vmatpush2.msra.mxu0 0.0
        %569 = vmatprep.subr.mxu0 0.0
        %570 = vmatpush2.msra.mxu0 0.0
        %571 = vmatprep.subr.mxu0 0.0
        %572 = vmatpush2.msra.mxu0 0.0
        %573 = vmatprep.mubr.f32.mxu0 0.0
        %574 = vmatmul.mubr.f32.gmra.mxu0 %v357
        %v575 = vpop.f32.mrf.mxu0
        %v576 = vadd.f32 0.0, %v575
        %v577 = vpop.f32.mrf.mxu0
        %578 = vdwg.mxu0
        %579 = vst.msk [vmem:[%s349] sm:$0xff] %vm355, %v576
        %s580 = sand.u32 %s142, 1
        %s581 = scalar_lea.sflag [#allocation4], %s580
        %s582 = sand.u32 %s142, 1
        %s583 = smul.addr %s582, 8
        %s584 = scalar_lea.vmem [#allocation10], %s583
        %s585 = sand.u32 %s29, 1
        %s586 = scalar_lea.sflag [#allocation12], %s585
        %s587 = sand.u32 %s170, 1
        %s588 = smul.addr %s587, 8
        %s589 = scalar_lea.vmem [#allocation11], %s588
        %s590 = sand.u32 %s29, 1
        %s591 = scalar_lea.sflag [#allocation12], %s590
        %s592 = sand.u32 %s198, 1
        %s593 = smul.addr %s592, 8
        %s594 = scalar_lea.vmem [#allocation13], %s593
        // Predicated region
        $region53: #{tpu_custom_call.1} parent=35 // pred_check
          %p595 = pneg %p152
        $region54: #{tpu_custom_call.1} parent=35 // pred_check_branch
          %597 = sbr.rel (%p595) target = $region56
        $region55: #{tpu_custom_call.1} parent=35 // pred_region
          %s599 = ssub.s32 128, 128
          %600 = vsyncadd %s581, %s599
          %s601 = sadd.s32 %s34, %s33
          %s602 = smul.addr %s601, 128
          %s603 = scalar_lea.hbm %s4, %s602
          %s605 = sshll.u32 %s584, 4
          %s606 = int_to_ptr.vmem [resolvable:$true] %s605
          %608 = dma.vmem_to_hbm [thread:$0]  %s606, 128, %s603, %s581
        $region56: #{tpu_custom_call.1} parent=35 // pred_fallthru
          _
        // Predicated region
        $region57: #{tpu_custom_call.1} parent=35 // pred_check
          %p609 = pneg %p180
        $region58: #{tpu_custom_call.1} parent=35 // pred_check_branch
          %611 = sbr.rel (%p609) target = $region60
        $region59: #{tpu_custom_call.1} parent=35 // pred_region
          %s613 = ssub.s32 128, 128
          %614 = vsyncadd %s586, %s613
          %s615 = sadd.s32 %s34, %s33
          %s616 = smul.addr %s615, 128
          %s617 = scalar_lea.hbm %s5, %s616
          %s619 = sshll.u32 %s589, 4
          %s620 = int_to_ptr.vmem [resolvable:$true] %s619
          %622 = dma.vmem_to_hbm [thread:$0]  %s620, 128, %s617, %s586
        $region60: #{tpu_custom_call.1} parent=35 // pred_fallthru
          _
        // Predicated region
        $region61: #{tpu_custom_call.1} parent=35 // pred_check
          %p623 = pneg %p208
        $region62: #{tpu_custom_call.1} parent=35 // pred_check_branch
          %625 = sbr.rel (%p623) target = $region64
        $region63: #{tpu_custom_call.1} parent=35 // pred_region
          %s627 = ssub.s32 128, 128
          %628 = vsyncadd %s591, %s627
          %s629 = sadd.s32 %s34, %s33
          %s630 = smul.addr %s629, 128
          %s631 = scalar_lea.hbm %s6, %s630
          %s633 = sshll.u32 %s594, 4
          %s634 = int_to_ptr.vmem [resolvable:$true] %s633
          %636 = dma.vmem_to_hbm [thread:$0]  %s634, 128, %s631, %s591
        $region64: #{tpu_custom_call.1} parent=35 // pred_fallthru
          _
      $region36: #{tpu_custom_call.1} parent=5 // pred_fallthru
        _
      %p637 = scmp.le.s32.totalorder 2, %s24
      // Predicated region
      $region65: #{tpu_custom_call.1} parent=5 // pred_check
        %p638 = pneg %p637
      $region66: #{tpu_custom_call.1} parent=5 // pred_check_branch
        %640 = sbr.rel (%p638) target = $region68
      $region67: #{tpu_custom_call.1} parent=5 // pred_region
        %s641 = ssub.s32 %s24, 2
        // Predicated region
        $region69: #{tpu_custom_call.1} parent=67 // pred_check
          %p642 = pneg %p158
        $region70: #{tpu_custom_call.1} parent=67 // pred_check_branch
          %644 = sbr.rel (%p642) target = $region72
        $region71: #{tpu_custom_call.1} parent=67 // pred_region
          %s645 = sand.u32 %s143, 1
          %s646 = scalar_lea.sflag [#allocation4], %s645
          %s647 = sand.u32 %s143, 1
          %s648 = smul.addr %s647, 8
          %s649 = scalar_lea.vmem [#allocation10], %s648
          %650 = dma.done %s646, 128
        $region72: #{tpu_custom_call.1} parent=67 // pred_fallthru
          _
        // Predicated region
        $region73: #{tpu_custom_call.1} parent=67 // pred_check
          %p651 = pneg %p186
        $region74: #{tpu_custom_call.1} parent=67 // pred_check_branch
          %653 = sbr.rel (%p651) target = $region76
        $region75: #{tpu_custom_call.1} parent=67 // pred_region
          %s654 = sand.u32 %s30, 1
          %s655 = scalar_lea.sflag [#allocation12], %s654
          %s656 = sand.u32 %s171, 1
          %s657 = smul.addr %s656, 8
          %s658 = scalar_lea.vmem [#allocation11], %s657
          %659 = dma.done %s655, 128
        $region76: #{tpu_custom_call.1} parent=67 // pred_fallthru
          _
        // Predicated region
        $region77: #{tpu_custom_call.1} parent=67 // pred_check
          %p660 = pneg %p214
        $region78: #{tpu_custom_call.1} parent=67 // pred_check_branch
          %662 = sbr.rel (%p660) target = $region80
        $region79: #{tpu_custom_call.1} parent=67 // pred_region
          %s663 = sand.u32 %s30, 1
          %s664 = scalar_lea.sflag [#allocation12], %s663
          %s665 = sand.u32 %s199, 1
          %s666 = smul.addr %s665, 8
          %s667 = scalar_lea.vmem [#allocation13], %s666
          %668 = dma.done %s664, 128
        $region80: #{tpu_custom_call.1} parent=67 // pred_fallthru
          _
      $region68: #{tpu_custom_call.1} parent=5 // pred_fallthru
        _
    $region6: #{tpu_custom_call.1} parent=1 // loop_footer
      %s28 = sadd.s32 1, %s24
    $region7: #{tpu_custom_call.1} parent=1 // loop_footer_branch
      %23 = sbr.rel target = $region3
    $region8: #{tpu_custom_call.1} parent=1 // loop_exit
      _
    %669 = vsyncpa [#allocation3], 1
    %s670 = scalar_lea.sflag [#allocation3], 1
    %671 = vsyncpa %s670, 1
    %672 = vsyncpa [#allocation6], 1
    %673 = vsyncpa [#allocation9], 1
    %674 = vsyncpa [#allocation4], 1
    %s675 = scalar_lea.sflag [#allocation4], 1
    %676 = vsyncpa %s675, 1
    %677 = vsyncpa [#allocation12], 1
    %s678 = scalar_lea.sflag [#allocation12], 1
    %679 = vsyncpa %s678, 1

</llo_original>
